<compile_context>
chip_gen: v7x
topology: tpu7x:2x2x1
jax: 0.10.0
libtpu: 0.0.40
codegen_flags: <defaults>
</compile_context>

<pallas_src>
import functools

import jax
import jax.numpy as jnp
from jax.experimental import pallas as pl
from jax.experimental.pallas import tpu as pltpu


def rgcn_kernel(R, N, Op, Kp,
                x_ref,       # VMEM (N, I)            node features, f32
                a_ref,       # VMEM (N, Kp)           [A_1 | ... | A_R | 0pad] along src, bf16
                w_ref,       # VMEM (I, (R+1)*Op)     [W_eff_1 | ... | W_eff_R | w_loop], f32
                norm_ref,    # VMEM (N, 1)            per-node norm
                bias_ref,    # VMEM (1, Op)           w_bias (padded)
                gamma_ref,   # VMEM (1, Op)           BN weight (padded)
                beta_ref,    # VMEM (1, Op)           BN bias (padded)
                o_ref,       # VMEM (N, Op)           lane-dense output
                m_ref,       # VMEM (N, (R+1)*Op) f32 staging for the first matmul
                xw_ref):     # VMEM (Kp, Op) bf16     stacked per-relation messages
    # 1) One wide MXU matmul produces every per-relation message block and the
    #    self-loop message.  Stage it straight to VMEM so the whole (N,(R+1)*Op)
    #    value does not stay live in vregs across the copy loop below.
    m_ref[...] = jnp.dot(x_ref[...], w_ref[...], preferred_element_type=jnp.float32)

    # 2) Re-stack per-relation blocks into (Kp, Op) bf16 staging so the scatter-sum
    #    is a single wide matmul on the native bf16 MXU path.  Slices are static
    #    and aligned (Op multiple of 128 lanes, N multiple of 8 sublanes).
    for r in range(R):
        xw_ref[r * N:(r + 1) * N, :] = m_ref[:, r * Op:(r + 1) * Op].astype(jnp.bfloat16)
    if Kp > R * N:  # zero the 256-alignment padding rows of the contracting dim
        xw_ref[R * N:, :] = jnp.zeros((Kp - R * N, Op), jnp.bfloat16)

    # 3) Fused scatter-sum over destinations for all relations at once:
    #    agg = [A_1 | ... | A_R] @ stack_r(xw_r),  bf16 x bf16 with f32 accumulation.
    agg = jnp.dot(a_ref[...], xw_ref[...], preferred_element_type=jnp.float32)

    # 4) apply_func (norm), bias, self-loop message (sliced from staging only now).
    node = agg * norm_ref[...] + bias_ref[...] + m_ref[:, R * Op:(R + 1) * Op]

    # 5) BatchNorm1d, training-mode batch statistics (biased var, eps=1e-5) + ReLU.
    #    Zero-padded output lanes stay exactly 0 (0-mean, 0-var, gamma=beta=0).
    # TODO(synk): BatchNorm1d running_mean/running_var state is not tracked here.
    mean = jnp.mean(node, axis=0, keepdims=True)
    var = jnp.mean((node - mean) ** 2, axis=0, keepdims=True)
    normed = (node - mean) * jax.lax.rsqrt(var + 1e-5)
    normed = normed * gamma_ref[...] + beta_ref[...]
    o_ref[...] = jnp.maximum(normed, 0.0).astype(o_ref.dtype)


def rgcn_forward(x, adj, w_rel, w_bases, w_loop, norm, bias, gamma, beta):
    N, I = x.shape
    R, B = w_rel.shape
    O = w_loop.shape[1]
    assert N % 8 == 0
    Op = ((O + 127) // 128) * 128            # lane-dense output width
    Kp = ((R * N + 255) // 256) * 256        # 256-aligned contracting dim (v6e/v7x MXU)
    pad = ((0, 0), (0, Op - O))

    # Fold w_rel into the bases in the wrapper (tiny einsum), pad the O side, and
    # build one weight slab  [W_eff_1 | ... | W_eff_R | w_loop]  for a single matmul.
    w_eff = jnp.einsum('rb,bio->rio', w_rel, w_bases)                 # (R, I, O)
    w_eff_p = jnp.pad(w_eff, ((0, 0),) + pad)                         # (R, I, Op)
    wl_p = jnp.pad(w_loop, pad)                                       # (I, Op)
    w_slab = jnp.concatenate([w_eff_p[r] for r in range(R)] + [wl_p], axis=1)

    bias_p = jnp.pad(bias, pad)
    gamma_p = jnp.pad(gamma, pad)
    beta_p = jnp.pad(beta, pad)

    # Flatten per-relation adjacency along the source axis so the scatter-sum is one
    # K=R*N matmul; pad K to a multiple of 256; keep it bf16 end-to-end (edge counts
    # are small integers -> exact in bf16, no in-kernel upcast / f32 temp).
    a_flat = jnp.transpose(adj, (1, 0, 2)).reshape(N, R * N)
    a_flat = jnp.pad(a_flat, ((0, 0), (0, Kp - R * N))).astype(jnp.bfloat16)

    kernel = functools.partial(rgcn_kernel, R, N, Op, Kp)
    grid_spec = pltpu.PrefetchScalarGridSpec(
        num_scalar_prefetch=0,
        grid=(1,),
        in_specs=[
            pl.BlockSpec((N, I), lambda i: (0, 0)),                # x
            pl.BlockSpec((N, Kp), lambda i: (0, 0)),               # adjacency (flat, bf16)
            pl.BlockSpec((I, (R + 1) * Op), lambda i: (0, 0)),     # [W_eff_* | w_loop]
            pl.BlockSpec((N, 1), lambda i: (0, 0)),                # norm
            pl.BlockSpec((1, Op), lambda i: (0, 0)),               # bias
            pl.BlockSpec((1, Op), lambda i: (0, 0)),               # gamma
            pl.BlockSpec((1, Op), lambda i: (0, 0)),               # beta
        ],
        out_specs=pl.BlockSpec((N, Op), lambda i: (0, 0)),
        scratch_shapes=[
            pltpu.VMEM((N, (R + 1) * Op), jnp.float32),            # m staging
            pltpu.VMEM((Kp, Op), jnp.bfloat16),                    # stacked messages (bf16)
        ],
    )

    # Advisory cost estimate for XLA scheduling around the custom call.
    flops = 2 * N * I * (R + 1) * Op + 2 * N * Kp * Op + 10 * N * Op
    bytes_accessed = (x.size * 4 + a_flat.size * 2 + w_slab.size * 4 + norm.size * 4
                      + 3 * Op * 4 + N * Op * 4)
    cost = pl.CostEstimate(flops=flops, transcendentals=Op, bytes_accessed=bytes_accessed)

    # Explicit VMEM budget with headroom (double-buffered inputs/outputs + scratch).
    vmem_needed = (2 * bytes_accessed
                   + N * (R + 1) * Op * 4          # m staging
                   + Kp * Op * 2)                  # bf16 xw staging
    vmem_limit = int(min(max(4 * vmem_needed, 8 * 1024 * 1024), 48 * 1024 * 1024))

    out_p = pl.pallas_call(
        kernel,
        out_shape=jax.ShapeDtypeStruct((N, Op), jnp.float32),
        grid_spec=grid_spec,
        compiler_params=pltpu.CompilerParams(
            dimension_semantics=("arbitrary",),
            vmem_limit_bytes=vmem_limit,
        ),
        cost_estimate=cost,
    )(x, a_flat, w_slab, norm, bias_p, gamma_p, beta_p)
    return out_p[:, :O]


def rgcn_reference(x, adj, w_rel, w_bases, w_loop, norm, bias, gamma, beta):
    W = jnp.einsum('rb,bio->rio', w_rel, w_bases)
    xw = jnp.einsum('ni,rio->rno', x, W)
    agg = jnp.einsum('rdn,rno->do', adj, xw)
    node = agg * norm + bias + x @ w_loop
    mean = jnp.mean(node, axis=0, keepdims=True)
    var = jnp.mean((node - mean) ** 2, axis=0, keepdims=True)
    node = (node - mean) * jax.lax.rsqrt(var + 1e-5) * gamma + beta
    return jnp.maximum(node, 0.0)


def xavier_uniform(key, shape, fan_in, fan_out, gain):
    limit = gain * (6.0 / (fan_in + fan_out)) ** 0.5
    return jax.random.uniform(key, shape, jnp.float32, -limit, limit)


if __name__ == "__main__":
    # Small synthetic graph: N nodes, E edges, R relations, B bases.
    N, I, O, R, B, E = 64, 32, 32, 4, 2, 256
    gain = 2.0 ** 0.5  # calculate_gain('relu')

    key = jax.random.PRNGKey(0)
    k_x, k_s, k_d, k_r, k_wl, k_wb, k_wr = jax.random.split(key, 7)

    x = jax.random.normal(k_x, (N, I), jnp.float32)

    src = jax.random.randint(k_s, (E,), 0, N)
    dst = jax.random.randint(k_d, (E,), 0, N)
    rel = jax.random.randint(k_r, (E,), 0, R)
    adj = jnp.zeros((R, N, N), jnp.float32).at[rel, dst, src].add(1.0)
    # bf16 adjacency is exact only for per-(rel,dst,src) multiplicities <= 256.
    assert float(adj.max()) <= 256.0
    in_deg = adj.sum(axis=(0, 2))
    norm = (1.0 / jnp.maximum(in_deg, 1.0)).reshape(N, 1).astype(jnp.float32)

    # Deterministic parameter init (mirrors reset_parameters shapes).
    w_loop = xavier_uniform(k_wl, (I, O), I, O, gain)
    w_bases = xavier_uniform(k_wb, (B, I, O), I * O, B * O, gain)
    w_rel = xavier_uniform(k_wr, (R, B), B, R, gain)
    bias = jnp.zeros((1, O), jnp.float32)      # zeros_(w_bias)
    gamma = jnp.ones((1, O), jnp.float32)      # BatchNorm1d.weight
    beta = jnp.zeros((1, O), jnp.float32)      # BatchNorm1d.bias
    # dropout=0.0 in this config -> the PyTorch module skips Dropout entirely.

    out = rgcn_forward(x, adj, w_rel, w_bases, w_loop, norm, bias, gamma, beta)
    out = jax.block_until_ready(out)

    ref = rgcn_reference(x, adj, w_rel, w_bases, w_loop, norm, bias, gamma, beta)
    assert out.shape == (N, O)
    # Tolerance accounts for bf16 staging of the stacked messages (f32 accumulation).
    assert jnp.allclose(out, ref, rtol=5e-3, atol=5e-3), float(jnp.abs(out - ref).max())

    print("KERNEL_OK")
</pallas_src>

<mosaic_0001>
module attributes {stable_mosaic.version = 11 : i64} {
  func.func @rgcn_kernel(%arg0: i32, %arg1: memref<64x32xf32, #tpu.memory_space<vmem>>, %arg2: memref<64x256xbf16, #tpu.memory_space<vmem>>, %arg3: memref<32x640xf32, #tpu.memory_space<vmem>>, %arg4: memref<64x1xf32, #tpu.memory_space<vmem>>, %arg5: memref<1x128xf32, #tpu.memory_space<vmem>>, %arg6: memref<1x128xf32, #tpu.memory_space<vmem>>, %arg7: memref<1x128xf32, #tpu.memory_space<vmem>>, %arg8: memref<64x128xf32, #tpu.memory_space<vmem>>, %arg9: memref<64x640xf32, #tpu.memory_space<vmem>>, %arg10: memref<256x128xbf16, #tpu.memory_space<vmem>>) attributes {dimension_semantics = [#tpu.dimension_semantics<arbitrary>], iteration_bounds = array<i64: 1>, scalar_prefetch = 0 : i64, scratch_operands = 2 : i64, tpu.core_type = #tpu.core_type<tc>, window_params = [{pipeline_mode = #tpu.pipeline_mode<synchronous>, transform_indices = @transform_0, window_bounds = array<i64: 64, 32>}, {pipeline_mode = #tpu.pipeline_mode<synchronous>, transform_indices = @transform_1, window_bounds = array<i64: 64, 256>}, {pipeline_mode = #tpu.pipeline_mode<synchronous>, transform_indices = @transform_2, window_bounds = array<i64: 32, 640>}, {pipeline_mode = #tpu.pipeline_mode<synchronous>, transform_indices = @transform_3, window_bounds = array<i64: 64, 1>}, {pipeline_mode = #tpu.pipeline_mode<synchronous>, transform_indices = @transform_4, window_bounds = array<i64: 1, 128>}, {pipeline_mode = #tpu.pipeline_mode<synchronous>, transform_indices = @transform_5, window_bounds = array<i64: 1, 128>}, {pipeline_mode = #tpu.pipeline_mode<synchronous>, transform_indices = @transform_6, window_bounds = array<i64: 1, 128>}, {pipeline_mode = #tpu.pipeline_mode<synchronous>, transform_indices = @transform_7, window_bounds = array<i64: 64, 128>}]} {
    %c0 = arith.constant 0 : index
    %c0_0 = arith.constant 0 : index
    %0 = vector.load %arg1[%c0, %c0_0] : memref<64x32xf32, #tpu.memory_space<vmem>>, vector<64x32xf32>
    %c0_1 = arith.constant 0 : index
    %c0_2 = arith.constant 0 : index
    %1 = vector.load %arg3[%c0_1, %c0_2] : memref<32x640xf32, #tpu.memory_space<vmem>>, vector<32x640xf32>
    %cst = arith.constant dense<0.000000e+00> : vector<64x640xf32>
    %2 = tpu.matmul %0, %1, %cst {dimension_numbers = #tpu.dot_dimension_numbers<[1], [0], [0], [1], [0, 0, 1, 1], [], []>} : vector<64x32xf32>, vector<32x640xf32>, vector<64x640xf32> -> vector<64x640xf32>
    %c0_3 = arith.constant 0 : index
    %c0_4 = arith.constant 0 : index
    %3 = vector.load %arg9[%c0_3, %c0_4] : memref<64x640xf32, #tpu.memory_space<vmem>>, vector<64x640xf32>
    tpu.vector_store %arg9[%c0_3, %c0_4], %2 {strides = array<i32>} : memref<64x640xf32, #tpu.memory_space<vmem>>, vector<64x640xf32>,
    %c0_5 = arith.constant 0 : index
    %c0_6 = arith.constant 0 : index
    %4 = vector.load %arg9[%c0_5, %c0_6] : memref<64x640xf32, #tpu.memory_space<vmem>>, vector<64x128xf32>
    %5 = arith.truncf %4 : vector<64x128xf32> to vector<64x128xbf16>
    %c0_7 = arith.constant 0 : index
    %c0_8 = arith.constant 0 : index
    %6 = vector.load %arg10[%c0_7, %c0_8] : memref<256x128xbf16, #tpu.memory_space<vmem>>, vector<64x128xbf16>
    tpu.vector_store %arg10[%c0_7, %c0_8], %5 {strides = array<i32>} : memref<256x128xbf16, #tpu.memory_space<vmem>>, vector<64x128xbf16>,
    %c0_9 = arith.constant 0 : index
    %c128 = arith.constant 128 : index
    %7 = vector.load %arg9[%c0_9, %c128] : memref<64x640xf32, #tpu.memory_space<vmem>>, vector<64x128xf32>
    %8 = arith.truncf %7 : vector<64x128xf32> to vector<64x128xbf16>
    %c64 = arith.constant 64 : index
    %c0_10 = arith.constant 0 : index
    %9 = vector.load %arg10[%c64, %c0_10] : memref<256x128xbf16, #tpu.memory_space<vmem>>, vector<64x128xbf16>
    tpu.vector_store %arg10[%c64, %c0_10], %8 {strides = array<i32>} : memref<256x128xbf16, #tpu.memory_space<vmem>>, vector<64x128xbf16>,
    %c0_11 = arith.constant 0 : index
    %c256 = arith.constant 256 : index
    %10 = vector.load %arg9[%c0_11, %c256] : memref<64x640xf32, #tpu.memory_space<vmem>>, vector<64x128xf32>
    %11 = arith.truncf %10 : vector<64x128xf32> to vector<64x128xbf16>
    %c128_12 = arith.constant 128 : index
    %c0_13 = arith.constant 0 : index
    %12 = vector.load %arg10[%c128_12, %c0_13] : memref<256x128xbf16, #tpu.memory_space<vmem>>, vector<64x128xbf16>
    tpu.vector_store %arg10[%c128_12, %c0_13], %11 {strides = array<i32>} : memref<256x128xbf16, #tpu.memory_space<vmem>>, vector<64x128xbf16>,
    %c0_14 = arith.constant 0 : index
    %c384 = arith.constant 384 : index
    %13 = vector.load %arg9[%c0_14, %c384] : memref<64x640xf32, #tpu.memory_space<vmem>>, vector<64x128xf32>
    %14 = arith.truncf %13 : vector<64x128xf32> to vector<64x128xbf16>
    %c192 = arith.constant 192 : index
    %c0_15 = arith.constant 0 : index
    %15 = vector.load %arg10[%c192, %c0_15] : memref<256x128xbf16, #tpu.memory_space<vmem>>, vector<64x128xbf16>
    tpu.vector_store %arg10[%c192, %c0_15], %14 {strides = array<i32>} : memref<256x128xbf16, #tpu.memory_space<vmem>>, vector<64x128xbf16>,
    %c0_16 = arith.constant 0 : index
    %c0_17 = arith.constant 0 : index
    %16 = vector.load %arg2[%c0_16, %c0_17] : memref<64x256xbf16, #tpu.memory_space<vmem>>, vector<64x256xbf16>
    %c0_18 = arith.constant 0 : index
    %c0_19 = arith.constant 0 : index
    %17 = vector.load %arg10[%c0_18, %c0_19] : memref<256x128xbf16, #tpu.memory_space<vmem>>, vector<256x128xbf16>
    %cst_20 = arith.constant dense<0.000000e+00> : vector<64x128xf32>
    %18 = tpu.matmul %16, %17, %cst_20 {dimension_numbers = #tpu.dot_dimension_numbers<[1], [0], [0], [1], [0, 0, 1, 1], [], []>} : vector<64x256xbf16>, vector<256x128xbf16>, vector<64x128xf32> -> vector<64x128xf32>
    %c0_21 = arith.constant 0 : index
    %c0_22 = arith.constant 0 : index
    %19 = vector.load %arg4[%c0_21, %c0_22] : memref<64x1xf32, #tpu.memory_space<vmem>>, vector<64x1xf32>
    %20 = vector.broadcast %19 : vector<64x1xf32> to vector<64x128xf32>
    %21 = arith.mulf %18, %20 : vector<64x128xf32>
    %c0_23 = arith.constant 0 : index
    %c0_24 = arith.constant 0 : index
    %22 = vector.load %arg5[%c0_23, %c0_24] : memref<1x128xf32, #tpu.memory_space<vmem>>, vector<1x128xf32>
    %23 = vector.broadcast %22 : vector<1x128xf32> to vector<64x128xf32>
    %24 = arith.addf %21, %23 : vector<64x128xf32>
    %c0_25 = arith.constant 0 : index
    %c512 = arith.constant 512 : index
    %25 = vector.load %arg9[%c0_25, %c512] : memref<64x640xf32, #tpu.memory_space<vmem>>, vector<64x128xf32>
    %26 = arith.addf %24, %25 : vector<64x128xf32>
    %cst_26 = arith.constant dense<0.000000e+00> : vector<128xf32>
    %27 = vector.multi_reduction <add>, %26, %cst_26 [0] : vector<64x128xf32> to vector<128xf32>
    %28 = vector.shape_cast %27 : vector<128xf32> to vector<1x128xf32>
    %cst_27 = arith.constant 6.400000e+01 : f32
    %29 = vector.broadcast %cst_27 : f32 to vector<1x128xf32>
    %30 = arith.divf %28, %29 : vector<1x128xf32>
    %31 = vector.broadcast %30 : vector<1x128xf32> to vector<64x128xf32>
    %32 = arith.subf %26, %31 : vector<64x128xf32>
    %33 = arith.mulf %32, %32 : vector<64x128xf32>
    %cst_28 = arith.constant dense<0.000000e+00> : vector<128xf32>
    %34 = vector.multi_reduction <add>, %33, %cst_28 [0] : vector<64x128xf32> to vector<128xf32>
    %35 = vector.shape_cast %34 : vector<128xf32> to vector<1x128xf32>
    %cst_29 = arith.constant 6.400000e+01 : f32
    %36 = vector.broadcast %cst_29 : f32 to vector<1x128xf32>
    %37 = arith.divf %35, %36 : vector<1x128xf32>
    %38 = vector.broadcast %30 : vector<1x128xf32> to vector<64x128xf32>
    %39 = arith.subf %26, %38 : vector<64x128xf32>
    %cst_30 = arith.constant 9.99999974E-6 : f32
    %40 = vector.broadcast %cst_30 : f32 to vector<1x128xf32>
    %41 = arith.addf %37, %40 : vector<1x128xf32>
    %42 = math.rsqrt %41 : vector<1x128xf32>
    %43 = vector.broadcast %42 : vector<1x128xf32> to vector<64x128xf32>
    %44 = arith.mulf %39, %43 : vector<64x128xf32>
    %c0_31 = arith.constant 0 : index
    %c0_32 = arith.constant 0 : index
    %45 = vector.load %arg6[%c0_31, %c0_32] : memref<1x128xf32, #tpu.memory_space<vmem>>, vector<1x128xf32>
    %46 = vector.broadcast %45 : vector<1x128xf32> to vector<64x128xf32>
    %47 = arith.mulf %44, %46 : vector<64x128xf32>
    %c0_33 = arith.constant 0 : index
    %c0_34 = arith.constant 0 : index
    %48 = vector.load %arg7[%c0_33, %c0_34] : memref<1x128xf32, #tpu.memory_space<vmem>>, vector<1x128xf32>
    %49 = vector.broadcast %48 : vector<1x128xf32> to vector<64x128xf32>
    %50 = arith.addf %47, %49 : vector<64x128xf32>
    %cst_35 = arith.constant 0.000000e+00 : f32
    %51 = vector.broadcast %cst_35 : f32 to vector<64x128xf32>
    %52 = arith.maximumf %50, %51 : vector<64x128xf32>
    %c0_36 = arith.constant 0 : index
    %c0_37 = arith.constant 0 : index
    %53 = vector.load %arg8[%c0_36, %c0_37] : memref<64x128xf32, #tpu.memory_space<vmem>>, vector<64x128xf32>
    tpu.vector_store %arg8[%c0_36, %c0_37], %52 {strides = array<i32>} : memref<64x128xf32, #tpu.memory_space<vmem>>, vector<64x128xf32>,
    return
  }
  func.func @transform_0(%arg0: i32) -> (i32, i32) {
    %c0_i32 = arith.constant 0 : i32
    %c0_i32_0 = arith.constant 0 : i32
    %c0_i32_1 = arith.constant 0 : i32
    return %c0_i32, %c0_i32_0 : i32, i32
  }
  func.func @transform_1(%arg0: i32) -> (i32, i32) {
    %c0_i32 = arith.constant 0 : i32
    %c0_i32_0 = arith.constant 0 : i32
    %c0_i32_1 = arith.constant 0 : i32
    return %c0_i32, %c0_i32_0 : i32, i32
  }
  func.func @transform_2(%arg0: i32) -> (i32, i32) {
    %c0_i32 = arith.constant 0 : i32
    %c0_i32_0 = arith.constant 0 : i32
    %c0_i32_1 = arith.constant 0 : i32
    return %c0_i32, %c0_i32_0 : i32, i32
  }
  func.func @transform_3(%arg0: i32) -> (i32, i32) {
    %c0_i32 = arith.constant 0 : i32
    %c0_i32_0 = arith.constant 0 : i32
    %c0_i32_1 = arith.constant 0 : i32
    return %c0_i32, %c0_i32_0 : i32, i32
  }
  func.func @transform_4(%arg0: i32) -> (i32, i32) {
    %c0_i32 = arith.constant 0 : i32
    %c0_i32_0 = arith.constant 0 : i32
    %c0_i32_1 = arith.constant 0 : i32
    return %c0_i32, %c0_i32_0 : i32, i32
  }
  func.func @transform_5(%arg0: i32) -> (i32, i32) {
    %c0_i32 = arith.constant 0 : i32
    %c0_i32_0 = arith.constant 0 : i32
    %c0_i32_1 = arith.constant 0 : i32
    return %c0_i32, %c0_i32_0 : i32, i32
  }
  func.func @transform_6(%arg0: i32) -> (i32, i32) {
    %c0_i32 = arith.constant 0 : i32
    %c0_i32_0 = arith.constant 0 : i32
    %c0_i32_1 = arith.constant 0 : i32
    return %c0_i32, %c0_i32_0 : i32, i32
  }
  func.func @transform_7(%arg0: i32) -> (i32, i32) {
    %c0_i32 = arith.constant 0 : i32
    %c0_i32_0 = arith.constant 0 : i32
    %c0_i32_1 = arith.constant 0 : i32
    return %c0_i32, %c0_i32_0 : i32, i32
  }
}

</mosaic_0001>

<llo_original>
// kernel: tpu_custom_call.1
$region0: #{tpu_custom_call.1}
  #allocation0 [shape = 'u32[]', space=smem, size = 0x4, offset = 0x4, fixed_abs, tag = 'smem constant byte address 0x4 - core index']
  #allocation1 [shape = 'u32[144,128]{1,0:T(1,128)}', space=vmem, size = 0x12000, scoped, tag = 'internal scratch']
  #allocation2 [shape = 'f32[64,640]{1,0:T(8,128)}', space=vmem, size = 0x28000, scoped, tag = 'scratch operand']
  #allocation3 [shape = 'bf16[256,128]{1,0:T(16,128)(2,1)}', space=vmem, size = 0x10000, scoped, tag = 'scratch operand']
  %s0 = inlined_call_operand.vmem [shape: f32[64,32], index: 0, kind: input, shape index: {}]
  %s1 = inlined_call_operand.hbm [shape: bf16[64,256], index: 1, kind: input, shape index: {}]
  %s2 = inlined_call_operand.vmem [shape: f32[32,640], index: 2, kind: input, shape index: {}]
  %s3 = inlined_call_operand.vmem [shape: f32[64,1], index: 3, kind: input, shape index: {}]
  %s4 = inlined_call_operand.vmem [shape: f32[1,128], index: 4, kind: input, shape index: {}]
  %s5 = inlined_call_operand.vmem [shape: f32[1,128], index: 5, kind: input, shape index: {}]
  %s6 = inlined_call_operand.vmem [shape: f32[1,128], index: 6, kind: input, shape index: {}]
  %s7 = inlined_call_operand.hbm [shape: f32[64,128], index: 7, kind: output, shape index: {}]
  %s8 = sld [smem:[#allocation0]]
  $region42: #{tpu_custom_call.1} parent=0
    _
  %s10 = ssub.s32 1, %s8
  %s11 = scalar_select 0, %s10, %s8
  $region1: #{tpu_custom_call.1} parent=0
    #allocation4 [shape = 'u8[32768]{0}', space=vmem, size = 0x8000, scoped, tag = 'input window, operand 1, single buffered']
    #allocation5 [shape = 's32[1]{0}', space=sflag, size = 0x4, scoped, tag = 'scoped memory for tpu_custom_call.1']
    #allocation6 [shape = 's32[1]{0}', space=sflag, size = 0x4, scoped, tag = 'scoped memory for tpu_custom_call.1']
    #allocation7 [shape = 'u8[32768]{0}', space=vmem, size = 0x8000, scoped, tag = 'output window, operand 0, single buffered']
    %12 = vsyncpa [#allocation5], 0
    %13 = vsyncpa [#allocation6], 0
    // Predicated region
    $region2: #{tpu_custom_call.1} parent=1 // pred_check
      _
    $region3: #{tpu_custom_call.1} parent=1 // pred_check_branch
      %15 = sbr.rel (0) target = $region5
    $region4: #{tpu_custom_call.1} parent=1 // pred_region
      _
    $region5: #{tpu_custom_call.1} parent=1 // pred_fallthru
      _
    // Predicated region
    $region6: #{tpu_custom_call.1} parent=1 // pred_check
      _
    $region7: #{tpu_custom_call.1} parent=1 // pred_check_branch
      %17 = sbr.rel (0) target = $region9
    $region8: #{tpu_custom_call.1} parent=1 // pred_region
      %s19 = ssub.s32 1024, 1024
      %20 = vsyncadd [#allocation5], %s19
      %s21 = sshll.u32 [#allocation4], 4
      %s22 = int_to_ptr.vmem [resolvable:$true] %s21
      %27 = dma.hbm_to_vmem [thread:$0]  %s1, 1024, %s22, [#allocation5], 128, 128, 8
    $region9: #{tpu_custom_call.1} parent=1 // pred_fallthru
      _
    // Predicated region
    $region10: #{tpu_custom_call.1} parent=1 // pred_check
      _
    $region11: #{tpu_custom_call.1} parent=1 // pred_check_branch
      %29 = sbr.rel (0) target = $region13
    $region12: #{tpu_custom_call.1} parent=1 // pred_region
      _
    $region13: #{tpu_custom_call.1} parent=1 // pred_fallthru
      _
    // Predicated region
    $region14: #{tpu_custom_call.1} parent=1 // pred_check
      _
    $region15: #{tpu_custom_call.1} parent=1 // pred_check_branch
      %31 = sbr.rel (0) target = $region17
    $region16: #{tpu_custom_call.1} parent=1 // pred_region
      _
    $region17: #{tpu_custom_call.1} parent=1 // pred_fallthru
      _
    // Predicated region
    $region18: #{tpu_custom_call.1} parent=1 // pred_check
      _
    $region19: #{tpu_custom_call.1} parent=1 // pred_check_branch
      %33 = sbr.rel (0) target = $region21
    $region20: #{tpu_custom_call.1} parent=1 // pred_region
      _
    $region21: #{tpu_custom_call.1} parent=1 // pred_fallthru
      _
    // Predicated region
    $region22: #{tpu_custom_call.1} parent=1 // pred_check
      _
    $region23: #{tpu_custom_call.1} parent=1 // pred_check_branch
      %35 = sbr.rel (0) target = $region25
    $region24: #{tpu_custom_call.1} parent=1 // pred_region
      _
    $region25: #{tpu_custom_call.1} parent=1 // pred_fallthru
      _
    // Predicated region
    $region26: #{tpu_custom_call.1} parent=1 // pred_check
      _
    $region27: #{tpu_custom_call.1} parent=1 // pred_check_branch
      %37 = sbr.rel (0) target = $region29
    $region28: #{tpu_custom_call.1} parent=1 // pred_region
      _
    $region29: #{tpu_custom_call.1} parent=1 // pred_fallthru
      _
    // Predicated region
    $region30: #{tpu_custom_call.1} parent=1 // pred_check
      _
    $region31: #{tpu_custom_call.1} parent=1 // pred_check_branch
      %39 = sbr.rel (0) target = $region33
    $region32: #{tpu_custom_call.1} parent=1 // pred_region
      %40 = dma.done [#allocation5], 1024
    $region33: #{tpu_custom_call.1} parent=1 // pred_fallthru
      _
    %v42 = vld [vmem:[%s0] sm:$0xff]
    %v43 = vld [vmem:[%s0 + $0x8] sm:$0xff]
    %v44 = vld [vmem:[%s0 + $0x10] sm:$0xff]
    %v45 = vld [vmem:[%s0 + $0x18] sm:$0xff]
    %v46 = vld [vmem:[%s0 + $0x20] sm:$0xff]
    %v47 = vld [vmem:[%s0 + $0x28] sm:$0xff]
    %v48 = vld [vmem:[%s0 + $0x30] sm:$0xff]
    %v49 = vld [vmem:[%s0 + $0x38] sm:$0xff]
    %v50 = vld [vmem:[%s2] sm:$0xff]
    %v51 = vld [vmem:[%s2 + $0x8] sm:$0xff]
    %v52 = vld [vmem:[%s2 + $0x10] sm:$0xff]
    %v53 = vld [vmem:[%s2 + $0x18] sm:$0xff]
    %v54 = vld [vmem:[%s2 + $0x20] sm:$0xff]
    %v55 = vld [vmem:[%s2 + $0x28] sm:$0xff]
    %v56 = vld [vmem:[%s2 + $0x30] sm:$0xff]
    %v57 = vld [vmem:[%s2 + $0x38] sm:$0xff]
    %v58 = vld [vmem:[%s2 + $0x40] sm:$0xff]
    %v59 = vld [vmem:[%s2 + $0x48] sm:$0xff]
    %v60 = vld [vmem:[%s2 + $0x50] sm:$0xff]
    %v61 = vld [vmem:[%s2 + $0x58] sm:$0xff]
    %v62 = vld [vmem:[%s2 + $0x60] sm:$0xff]
    %v63 = vld [vmem:[%s2 + $0x68] sm:$0xff]
    %v64 = vld [vmem:[%s2 + $0x70] sm:$0xff]
    %v65 = vld [vmem:[%s2 + $0x78] sm:$0xff]
    %v66 = vld [vmem:[%s2 + $0x80] sm:$0xff]
    %v67 = vld [vmem:[%s2 + $0x88] sm:$0xff]
    %v68 = vld [vmem:[%s2 + $0x90] sm:$0xff]
    %v69 = vld [vmem:[%s2 + $0x98] sm:$0xff]
    %vm70 = vcmask 261120
    %v72 = vsel %vm70, %v42, 0
    %v75 = vsel %vm70, %v43, 0
    %v78 = vsel %vm70, %v44, 0
    %v81 = vsel %vm70, %v45, 0
    %v84 = vsel %vm70, %v46, 0
    %v87 = vsel %vm70, %v47, 0
    %v90 = vsel %vm70, %v48, 0
    %v93 = vsel %vm70, %v49, 0
    %95 = vmatprep.subr.mxu0 %v51
    %96 = vmatpush1.msra.mxu0 %v50
    %97 = vmatprep.subr.mxu0 %v56
    %98 = vmatpush1.msra.mxu0 %v55
    %99 = vmatprep.subr.mxu0 %v61
    %100 = vmatpush1.msra.mxu0 %v60
    %101 = vmatprep.subr.mxu0 %v66
    %102 = vmatpush1.msra.mxu0 %v65
    %103 = vmatprep.subr.mxu0 0.0
    %104 = vmatpush1.msra.mxu0 0.0
    %105 = vmatprep.subr.mxu0 0.0
    %106 = vmatpush1.msra.mxu0 0.0
    %107 = vmatprep.subr.mxu0 0.0
    %108 = vmatpush1.msra.mxu0 0.0
    %109 = vmatprep.subr.mxu0 0.0
    %110 = vmatpush1.msra.mxu0 0.0
    %111 = vmatprep.subr.mxu0 0.0
    %112 = vmatpush1.msra.mxu0 0.0
    %113 = vmatprep.subr.mxu0 0.0
    %114 = vmatpush1.msra.mxu0 0.0
    %115 = vmatprep.subr.mxu0 0.0
    %116 = vmatpush1.msra.mxu0 0.0
    %117 = vmatprep.subr.mxu0 0.0
    %118 = vmatpush1.msra.mxu0 0.0
    %119 = vmatprep.subr.mxu0 0.0
    %120 = vmatpush1.msra.mxu0 0.0
    %121 = vmatprep.subr.mxu0 0.0
    %122 = vmatpush1.msra.mxu0 0.0
    %123 = vmatprep.subr.mxu0 0.0
    %124 = vmatpush1.msra.mxu0 0.0
    %125 = vmatprep.subr.mxu0 0.0
    %126 = vmatpush1.msra.mxu0 0.0
    %127 = vmatprep.subr.mxu0 0.0
    %128 = vmatpush1.msra.mxu0 0.0
    %129 = vmatprep.subr.mxu0 0.0
    %130 = vmatpush1.msra.mxu0 0.0
    %131 = vmatprep.subr.mxu0 0.0
    %132 = vmatpush1.msra.mxu0 0.0
    %133 = vmatprep.subr.mxu0 0.0
    %134 = vmatpush1.msra.mxu0 0.0
    %135 = vmatprep.subr.mxu0 0.0
    %136 = vmatpush1.msra.mxu0 0.0
    %137 = vmatprep.subr.mxu0 0.0
    %138 = vmatpush1.msra.mxu0 0.0
    %139 = vmatprep.subr.mxu0 0.0
    %140 = vmatpush1.msra.mxu0 0.0
    %141 = vmatprep.subr.mxu0 0.0
    %142 = vmatpush1.msra.mxu0 0.0
    %143 = vmatprep.subr.mxu0 0.0
    %144 = vmatpush1.msra.mxu0 0.0
    %145 = vmatprep.subr.mxu0 0.0
    %146 = vmatpush1.msra.mxu0 0.0
    %147 = vmatprep.subr.mxu0 0.0
    %148 = vmatpush1.msra.mxu0 0.0
    %149 = vmatprep.subr.mxu0 0.0
    %150 = vmatpush1.msra.mxu0 0.0
    %151 = vmatprep.subr.mxu0 0.0
    %152 = vmatpush1.msra.mxu0 0.0
    %153 = vmatprep.subr.mxu0 0.0
    %154 = vmatpush1.msra.mxu0 0.0
    %155 = vmatprep.subr.mxu0 0.0
    %156 = vmatpush1.msra.mxu0 0.0
    %157 = vmatprep.subr.mxu0 0.0
    %158 = vmatpush1.msra.mxu0 0.0
    %159 = vmatprep.mubr.f32.mxu0 0.0
    %160 = vmatmul.mubr.f32.gmra.mrb[0].mxu0 %v72
    %v161 = vpop.f32.mrb[0].mxu0
    %v162 = vadd.f32 0.0, %v161
    %v163 = vpop.f32.mrb[0].mxu0
    %v164 = vadd.f32 0.0, %v163
    %165 = vmatprep.mubr.f32.mxu0 0.0
    %166 = vmatmul.mubr.f32.gmra.mrb[0].mxu0 %v75
    %v167 = vpop.f32.mrb[0].mxu0
    %v168 = vadd.f32 0.0, %v167
    %v169 = vpop.f32.mrb[0].mxu0
    %v170 = vadd.f32 0.0, %v169
    %171 = vmatprep.mubr.f32.mxu0 0.0
    %172 = vmatmul.mubr.f32.gmra.mrb[0].mxu0 %v78
    %v173 = vpop.f32.mrb[0].mxu0
    %v174 = vadd.f32 0.0, %v173
    %v175 = vpop.f32.mrb[0].mxu0
    %v176 = vadd.f32 0.0, %v175
    %177 = vmatprep.mubr.f32.mxu0 0.0
    %178 = vmatmul.mubr.f32.gmra.mrb[0].mxu0 %v81
    %v179 = vpop.f32.mrb[0].mxu0
    %v180 = vadd.f32 0.0, %v179
    %v181 = vpop.f32.mrb[0].mxu0
    %v182 = vadd.f32 0.0, %v181
    %183 = vmatprep.mubr.f32.mxu0 0.0
    %184 = vmatmul.mubr.f32.gmra.mrb[0].mxu0 %v84
    %v185 = vpop.f32.mrb[0].mxu0
    %v186 = vadd.f32 0.0, %v185
    %v187 = vpop.f32.mrb[0].mxu0
    %v188 = vadd.f32 0.0, %v187
    %189 = vmatprep.mubr.f32.mxu0 0.0
    %190 = vmatmul.mubr.f32.gmra.mrb[0].mxu0 %v87
    %v191 = vpop.f32.mrb[0].mxu0
    %v192 = vadd.f32 0.0, %v191
    %v193 = vpop.f32.mrb[0].mxu0
    %v194 = vadd.f32 0.0, %v193
    %195 = vmatprep.mubr.f32.mxu0 0.0
    %196 = vmatmul.mubr.f32.gmra.mrb[0].mxu0 %v90
    %v197 = vpop.f32.mrb[0].mxu0
    %v198 = vadd.f32 0.0, %v197
    %v199 = vpop.f32.mrb[0].mxu0
    %v200 = vadd.f32 0.0, %v199
    %201 = vmatprep.mubr.f32.mxu0 0.0
    %202 = vmatmul.mubr.f32.gmra.mrb[0].mxu0 %v93
    %v203 = vpop.f32.mrb[0].mxu0
    %v204 = vadd.f32 0.0, %v203
    %v205 = vpop.f32.mrb[0].mxu0
    %v206 = vadd.f32 0.0, %v205
    %207 = vdwg.mxu0
    %208 = vmatprep.subr.mxu0 %v53
    %209 = vmatpush1.msra.mxu0 %v52
    %210 = vmatprep.subr.mxu0 %v58
    %211 = vmatpush1.msra.mxu0 %v57
    %212 = vmatprep.subr.mxu0 %v63
    %213 = vmatpush1.msra.mxu0 %v62
    %214 = vmatprep.subr.mxu0 %v68
    %215 = vmatpush1.msra.mxu0 %v67
    %216 = vmatprep.subr.mxu0 0.0
    %217 = vmatpush1.msra.mxu0 0.0
    %218 = vmatprep.subr.mxu0 0.0
    %219 = vmatpush1.msra.mxu0 0.0
    %220 = vmatprep.subr.mxu0 0.0
    %221 = vmatpush1.msra.mxu0 0.0
    %222 = vmatprep.subr.mxu0 0.0
    %223 = vmatpush1.msra.mxu0 0.0
    %224 = vmatprep.subr.mxu0 0.0
    %225 = vmatpush1.msra.mxu0 0.0
    %226 = vmatprep.subr.mxu0 0.0
    %227 = vmatpush1.msra.mxu0 0.0
    %228 = vmatprep.subr.mxu0 0.0
    %229 = vmatpush1.msra.mxu0 0.0
    %230 = vmatprep.subr.mxu0 0.0
    %231 = vmatpush1.msra.mxu0 0.0
    %232 = vmatprep.subr.mxu0 0.0
    %233 = vmatpush1.msra.mxu0 0.0
    %234 = vmatprep.subr.mxu0 0.0
    %235 = vmatpush1.msra.mxu0 0.0
    %236 = vmatprep.subr.mxu0 0.0
    %237 = vmatpush1.msra.mxu0 0.0
    %238 = vmatprep.subr.mxu0 0.0
    %239 = vmatpush1.msra.mxu0 0.0
    %240 = vmatprep.subr.mxu0 0.0
    %241 = vmatpush1.msra.mxu0 0.0
    %242 = vmatprep.subr.mxu0 0.0
    %243 = vmatpush1.msra.mxu0 0.0
    %244 = vmatprep.subr.mxu0 0.0
    %245 = vmatpush1.msra.mxu0 0.0
    %246 = vmatprep.subr.mxu0 0.0
    %247 = vmatpush1.msra.mxu0 0.0
    %248 = vmatprep.subr.mxu0 0.0
    %249 = vmatpush1.msra.mxu0 0.0
    %250 = vmatprep.subr.mxu0 0.0
    %251 = vmatpush1.msra.mxu0 0.0
    %252 = vmatprep.subr.mxu0 0.0
    %253 = vmatpush1.msra.mxu0 0.0
    %254 = vmatprep.subr.mxu0 0.0
    %255 = vmatpush1.msra.mxu0 0.0
    %256 = vmatprep.subr.mxu0 0.0
    %257 = vmatpush1.msra.mxu0 0.0
    %258 = vmatprep.subr.mxu0 0.0
    %259 = vmatpush1.msra.mxu0 0.0
    %260 = vmatprep.subr.mxu0 0.0
    %261 = vmatpush1.msra.mxu0 0.0
    %262 = vmatprep.subr.mxu0 0.0
    %263 = vmatpush1.msra.mxu0 0.0
    %264 = vmatprep.subr.mxu0 0.0
    %265 = vmatpush1.msra.mxu0 0.0
    %266 = vmatprep.subr.mxu0 0.0
    %267 = vmatpush1.msra.mxu0 0.0
    %268 = vmatprep.subr.mxu0 0.0
    %269 = vmatpush1.msra.mxu0 0.0
    %270 = vmatprep.subr.mxu0 0.0
    %271 = vmatpush1.msra.mxu0 0.0
    %272 = vmatprep.mubr.f32.mxu0 0.0
    %273 = vmatmul.mubr.f32.gmra.mrb[0].mxu0 %v72
    %v274 = vpop.f32.mrb[0].mxu0
    %v275 = vadd.f32 0.0, %v274
    %v276 = vpop.f32.mrb[0].mxu0
    %v277 = vadd.f32 0.0, %v276
    %278 = vmatprep.mubr.f32.mxu0 0.0
    %279 = vmatmul.mubr.f32.gmra.mrb[0].mxu0 %v75
    %v280 = vpop.f32.mrb[0].mxu0
    %v281 = vadd.f32 0.0, %v280
    %v282 = vpop.f32.mrb[0].mxu0
    %v283 = vadd.f32 0.0, %v282
    %284 = vmatprep.mubr.f32.mxu0 0.0
    %285 = vmatmul.mubr.f32.gmra.mrb[0].mxu0 %v78
    %v286 = vpop.f32.mrb[0].mxu0
    %v287 = vadd.f32 0.0, %v286
    %v288 = vpop.f32.mrb[0].mxu0
    %v289 = vadd.f32 0.0, %v288
    %290 = vmatprep.mubr.f32.mxu0 0.0
    %291 = vmatmul.mubr.f32.gmra.mrb[0].mxu0 %v81
    %v292 = vpop.f32.mrb[0].mxu0
    %v293 = vadd.f32 0.0, %v292
    %v294 = vpop.f32.mrb[0].mxu0
    %v295 = vadd.f32 0.0, %v294
    %296 = vmatprep.mubr.f32.mxu0 0.0
    %297 = vmatmul.mubr.f32.gmra.mrb[0].mxu0 %v84
    %v298 = vpop.f32.mrb[0].mxu0
    %v299 = vadd.f32 0.0, %v298
    %v300 = vpop.f32.mrb[0].mxu0
    %v301 = vadd.f32 0.0, %v300
    %302 = vmatprep.mubr.f32.mxu0 0.0
    %303 = vmatmul.mubr.f32.gmra.mrb[0].mxu0 %v87
    %v304 = vpop.f32.mrb[0].mxu0
    %v305 = vadd.f32 0.0, %v304
    %v306 = vpop.f32.mrb[0].mxu0
    %v307 = vadd.f32 0.0, %v306
    %308 = vmatprep.mubr.f32.mxu0 0.0
    %309 = vmatmul.mubr.f32.gmra.mrb[0].mxu0 %v90
    %v310 = vpop.f32.mrb[0].mxu0
    %v311 = vadd.f32 0.0, %v310
    %v312 = vpop.f32.mrb[0].mxu0
    %v313 = vadd.f32 0.0, %v312
    %314 = vmatprep.mubr.f32.mxu0 0.0
    %315 = vmatmul.mubr.f32.gmra.mrb[0].mxu0 %v93
    %v316 = vpop.f32.mrb[0].mxu0
    %v317 = vadd.f32 0.0, %v316
    %v318 = vpop.f32.mrb[0].mxu0
    %v319 = vadd.f32 0.0, %v318
    %320 = vdwg.mxu0
    %321 = vmatprep.subr.mxu0 0.0
    %322 = vmatpush1.msra.mxu0 %v54
    %323 = vmatprep.subr.mxu0 0.0
    %324 = vmatpush1.msra.mxu0 %v59
    %325 = vmatprep.subr.mxu0 0.0
    %326 = vmatpush1.msra.mxu0 %v64
    %327 = vmatprep.subr.mxu0 0.0
    %328 = vmatpush1.msra.mxu0 %v69
    %329 = vmatprep.subr.mxu0 0.0
    %330 = vmatpush1.msra.mxu0 0.0
    %331 = vmatprep.subr.mxu0 0.0
    %332 = vmatpush1.msra.mxu0 0.0
    %333 = vmatprep.subr.mxu0 0.0
    %334 = vmatpush1.msra.mxu0 0.0
    %335 = vmatprep.subr.mxu0 0.0
    %336 = vmatpush1.msra.mxu0 0.0
    %337 = vmatprep.subr.mxu0 0.0
    %338 = vmatpush1.msra.mxu0 0.0
    %339 = vmatprep.subr.mxu0 0.0
    %340 = vmatpush1.msra.mxu0 0.0
    %341 = vmatprep.subr.mxu0 0.0
    %342 = vmatpush1.msra.mxu0 0.0
    %343 = vmatprep.subr.mxu0 0.0
    %344 = vmatpush1.msra.mxu0 0.0
    %345 = vmatprep.subr.mxu0 0.0
    %346 = vmatpush1.msra.mxu0 0.0
    %347 = vmatprep.subr.mxu0 0.0
    %348 = vmatpush1.msra.mxu0 0.0
    %349 = vmatprep.subr.mxu0 0.0
    %350 = vmatpush1.msra.mxu0 0.0
    %351 = vmatprep.subr.mxu0 0.0
    %352 = vmatpush1.msra.mxu0 0.0
    %353 = vmatprep.subr.mxu0 0.0
    %354 = vmatpush1.msra.mxu0 0.0
    %355 = vmatprep.subr.mxu0 0.0
    %356 = vmatpush1.msra.mxu0 0.0
    %357 = vmatprep.subr.mxu0 0.0
    %358 = vmatpush1.msra.mxu0 0.0
    %359 = vmatprep.subr.mxu0 0.0
    %360 = vmatpush1.msra.mxu0 0.0
    %361 = vmatprep.subr.mxu0 0.0
    %362 = vmatpush1.msra.mxu0 0.0
    %363 = vmatprep.subr.mxu0 0.0
    %364 = vmatpush1.msra.mxu0 0.0
    %365 = vmatprep.subr.mxu0 0.0
    %366 = vmatpush1.msra.mxu0 0.0
    %367 = vmatprep.subr.mxu0 0.0
    %368 = vmatpush1.msra.mxu0 0.0
    %369 = vmatprep.subr.mxu0 0.0
    %370 = vmatpush1.msra.mxu0 0.0
    %371 = vmatprep.subr.mxu0 0.0
    %372 = vmatpush1.msra.mxu0 0.0
    %373 = vmatprep.subr.mxu0 0.0
    %374 = vmatpush1.msra.mxu0 0.0
    %375 = vmatprep.subr.mxu0 0.0
    %376 = vmatpush1.msra.mxu0 0.0
    %377 = vmatprep.subr.mxu0 0.0
    %378 = vmatpush1.msra.mxu0 0.0
    %379 = vmatprep.subr.mxu0 0.0
    %380 = vmatpush1.msra.mxu0 0.0
    %381 = vmatprep.subr.mxu0 0.0
    %382 = vmatpush1.msra.mxu0 0.0
    %383 = vmatprep.subr.mxu0 0.0
    %384 = vmatpush1.msra.mxu0 0.0
    %385 = vmatprep.mubr.f32.mxu0 0.0
    %386 = vmatmul.mubr.f32.gmra.mrb[0].mxu0 %v72
    %v387 = vpop.f32.mrb[0].mxu0
    %v388 = vadd.f32 0.0, %v387
    %v389 = vpop.f32.mrb[0].mxu0
    %390 = vmatprep.mubr.f32.mxu0 0.0
    %391 = vmatmul.mubr.f32.gmra.mrb[0].mxu0 %v75
    %v392 = vpop.f32.mrb[0].mxu0
    %v393 = vadd.f32 0.0, %v392
    %v394 = vpop.f32.mrb[0].mxu0
    %395 = vmatprep.mubr.f32.mxu0 0.0
    %396 = vmatmul.mubr.f32.gmra.mrb[0].mxu0 %v78
    %v397 = vpop.f32.mrb[0].mxu0
    %v398 = vadd.f32 0.0, %v397
    %v399 = vpop.f32.mrb[0].mxu0
    %400 = vmatprep.mubr.f32.mxu0 0.0
    %401 = vmatmul.mubr.f32.gmra.mrb[0].mxu0 %v81
    %v402 = vpop.f32.mrb[0].mxu0
    %v403 = vadd.f32 0.0, %v402
    %v404 = vpop.f32.mrb[0].mxu0
    %405 = vmatprep.mubr.f32.mxu0 0.0
    %406 = vmatmul.mubr.f32.gmra.mrb[0].mxu0 %v84
    %v407 = vpop.f32.mrb[0].mxu0
    %v408 = vadd.f32 0.0, %v407
    %v409 = vpop.f32.mrb[0].mxu0
    %410 = vmatprep.mubr.f32.mxu0 0.0
    %411 = vmatmul.mubr.f32.gmra.mrb[0].mxu0 %v87
    %v412 = vpop.f32.mrb[0].mxu0
    %v413 = vadd.f32 0.0, %v412
    %v414 = vpop.f32.mrb[0].mxu0
    %415 = vmatprep.mubr.f32.mxu0 0.0
    %416 = vmatmul.mubr.f32.gmra.mrb[0].mxu0 %v90
    %v417 = vpop.f32.mrb[0].mxu0
    %v418 = vadd.f32 0.0, %v417
    %v419 = vpop.f32.mrb[0].mxu0
    %420 = vmatprep.mubr.f32.mxu0 0.0
    %421 = vmatmul.mubr.f32.gmra.mrb[0].mxu0 %v93
    %v422 = vpop.f32.mrb[0].mxu0
    %v423 = vadd.f32 0.0, %v422
    %v424 = vpop.f32.mrb[0].mxu0
    %425 = vdwg.mxu0
    %426 = vst [vmem:[#allocation2] sm:$0xff] %v162
    %427 = vst [vmem:[#allocation2 + $0x8] sm:$0xff] %v164
    %428 = vst [vmem:[#allocation2 + $0x10] sm:$0xff] %v275
    %429 = vst [vmem:[#allocation2 + $0x18] sm:$0xff] %v277
    %430 = vst [vmem:[#allocation2 + $0x20] sm:$0xff] %v388
    %431 = vst [vmem:[#allocation2 + $0x28] sm:$0xff] %v168
    %432 = vst [vmem:[#allocation2 + $0x30] sm:$0xff] %v170
    %433 = vst [vmem:[#allocation2 + $0x38] sm:$0xff] %v281
    %434 = vst [vmem:[#allocation2 + $0x40] sm:$0xff] %v283
    %435 = vst [vmem:[#allocation2 + $0x48] sm:$0xff] %v393
    %436 = vst [vmem:[#allocation2 + $0x50] sm:$0xff] %v174
    %437 = vst [vmem:[#allocation2 + $0x58] sm:$0xff] %v176
    %438 = vst [vmem:[#allocation2 + $0x60] sm:$0xff] %v287
    %439 = vst [vmem:[#allocation2 + $0x68] sm:$0xff] %v289
    %440 = vst [vmem:[#allocation2 + $0x70] sm:$0xff] %v398
    %441 = vst [vmem:[#allocation2 + $0x78] sm:$0xff] %v180
    %442 = vst [vmem:[#allocation2 + $0x80] sm:$0xff] %v182
    %443 = vst [vmem:[#allocation2 + $0x88] sm:$0xff] %v293
    %444 = vst [vmem:[#allocation2 + $0x90] sm:$0xff] %v295
    %445 = vst [vmem:[#allocation2 + $0x98] sm:$0xff] %v403
    %446 = vst [vmem:[#allocation2 + $0xa0] sm:$0xff] %v186
    %447 = vst [vmem:[#allocation2 + $0xa8] sm:$0xff] %v188
    %448 = vst [vmem:[#allocation2 + $0xb0] sm:$0xff] %v299
    %449 = vst [vmem:[#allocation2 + $0xb8] sm:$0xff] %v301
    %450 = vst [vmem:[#allocation2 + $0xc0] sm:$0xff] %v408
    %451 = vst [vmem:[#allocation2 + $0xc8] sm:$0xff] %v192
    %452 = vst [vmem:[#allocation2 + $0xd0] sm:$0xff] %v194
    %453 = vst [vmem:[#allocation2 + $0xd8] sm:$0xff] %v305
    %454 = vst [vmem:[#allocation2 + $0xe0] sm:$0xff] %v307
    %455 = vst [vmem:[#allocation2 + $0xe8] sm:$0xff] %v413
    %456 = vst [vmem:[#allocation2 + $0xf0] sm:$0xff] %v198
    %457 = vst [vmem:[#allocation2 + $0xf8] sm:$0xff] %v200
    %458 = vst [vmem:[#allocation2 + $0x100] sm:$0xff] %v311
    %459 = vst [vmem:[#allocation2 + $0x108] sm:$0xff] %v313
    %460 = vst [vmem:[#allocation2 + $0x110] sm:$0xff] %v418
    %461 = vst [vmem:[#allocation2 + $0x118] sm:$0xff] %v204
    %462 = vst [vmem:[#allocation2 + $0x120] sm:$0xff] %v206
    %463 = vst [vmem:[#allocation2 + $0x128] sm:$0xff] %v317
    %464 = vst [vmem:[#allocation2 + $0x130] sm:$0xff] %v319
    %465 = vst [vmem:[#allocation2 + $0x138] sm:$0xff] %v423
    %v466 = vld [vmem:[#allocation2] sm:$0xff]
    %v467 = vld [vmem:[#allocation2 + $0x28] sm:$0xff]
    %v468 = vld [vmem:[#allocation2 + $0x50] sm:$0xff]
    %v469 = vld [vmem:[#allocation2 + $0x78] sm:$0xff]
    %v470 = vld [vmem:[#allocation2 + $0xa0] sm:$0xff]
    %v471 = vld [vmem:[#allocation2 + $0xc8] sm:$0xff]
    %v472 = vld [vmem:[#allocation2 + $0xf0] sm:$0xff]
    %v473 = vld [vmem:[#allocation2 + $0x118] sm:$0xff]
    %v474 = vpack.c.bf16 %v467, %v466
    %v475 = vpack.c.bf16 %v469, %v468
    %v476 = vpack.c.bf16 %v471, %v470
    %v477 = vpack.c.bf16 %v473, %v472
    %478 = vst [vmem:[#allocation3] sm:$0xff] %v474
    %479 = vst [vmem:[#allocation3 + $0x8] sm:$0xff] %v475
    %480 = vst [vmem:[#allocation3 + $0x10] sm:$0xff] %v476
    %481 = vst [vmem:[#allocation3 + $0x18] sm:$0xff] %v477
    %v482 = vld [vmem:[#allocation2 + $0x8] sm:$0xff]
    %v483 = vld [vmem:[#allocation2 + $0x30] sm:$0xff]
    %v484 = vld [vmem:[#allocation2 + $0x58] sm:$0xff]
    %v485 = vld [vmem:[#allocation2 + $0x80] sm:$0xff]
    %v486 = vld [vmem:[#allocation2 + $0xa8] sm:$0xff]
    %v487 = vld [vmem:[#allocation2 + $0xd0] sm:$0xff]
    %v488 = vld [vmem:[#allocation2 + $0xf8] sm:$0xff]
    %v489 = vld [vmem:[#allocation2 + $0x120] sm:$0xff]
    %v490 = vpack.c.bf16 %v483, %v482
    %v491 = vpack.c.bf16 %v485, %v484
    %v492 = vpack.c.bf16 %v487, %v486
    %v493 = vpack.c.bf16 %v489, %v488
    %494 = vst [vmem:[#allocation3 + $0x20] sm:$0xff] %v490
    %495 = vst [vmem:[#allocation3 + $0x28] sm:$0xff] %v491
    %496 = vst [vmem:[#allocation3 + $0x30] sm:$0xff] %v492
    %497 = vst [vmem:[#allocation3 + $0x38] sm:$0xff] %v493
    %v498 = vld [vmem:[#allocation2 + $0x10] sm:$0xff]
    %v499 = vld [vmem:[#allocation2 + $0x38] sm:$0xff]
    %v500 = vld [vmem:[#allocation2 + $0x60] sm:$0xff]
    %v501 = vld [vmem:[#allocation2 + $0x88] sm:$0xff]
    %v502 = vld [vmem:[#allocation2 + $0xb0] sm:$0xff]
    %v503 = vld [vmem:[#allocation2 + $0xd8] sm:$0xff]
    %v504 = vld [vmem:[#allocation2 + $0x100] sm:$0xff]
    %v505 = vld [vmem:[#allocation2 + $0x128] sm:$0xff]
    %v506 = vpack.c.bf16 %v499, %v498
    %v507 = vpack.c.bf16 %v501, %v500
    %v508 = vpack.c.bf16 %v503, %v502
    %v509 = vpack.c.bf16 %v505, %v504
    %510 = vst [vmem:[#allocation3 + $0x40] sm:$0xff] %v506
    %511 = vst [vmem:[#allocation3 + $0x48] sm:$0xff] %v507
    %512 = vst [vmem:[#allocation3 + $0x50] sm:$0xff] %v508
    %513 = vst [vmem:[#allocation3 + $0x58] sm:$0xff] %v509
    %v514 = vld [vmem:[#allocation2 + $0x18] sm:$0xff]
    %v515 = vld [vmem:[#allocation2 + $0x40] sm:$0xff]
    %v516 = vld [vmem:[#allocation2 + $0x68] sm:$0xff]
    %v517 = vld [vmem:[#allocation2 + $0x90] sm:$0xff]
    %v518 = vld [vmem:[#allocation2 + $0xb8] sm:$0xff]
    %v519 = vld [vmem:[#allocation2 + $0xe0] sm:$0xff]
    %v520 = vld [vmem:[#allocation2 + $0x108] sm:$0xff]
    %v521 = vld [vmem:[#allocation2 + $0x130] sm:$0xff]
    %v522 = vpack.c.bf16 %v515, %v514
    %v523 = vpack.c.bf16 %v517, %v516
    %v524 = vpack.c.bf16 %v519, %v518
    %v525 = vpack.c.bf16 %v521, %v520
    %526 = vst [vmem:[#allocation3 + $0x60] sm:$0xff] %v522
    %527 = vst [vmem:[#allocation3 + $0x68] sm:$0xff] %v523
    %528 = vst [vmem:[#allocation3 + $0x70] sm:$0xff] %v524
    %529 = vst [vmem:[#allocation3 + $0x78] sm:$0xff] %v525
    %v530 = vld [vmem:[#allocation4] sm:$0xff]
    %v531 = vld [vmem:[#allocation4 + $0x8] sm:$0xff]
    %v532 = vld [vmem:[#allocation4 + $0x10] sm:$0xff]
    %v533 = vld [vmem:[#allocation4 + $0x18] sm:$0xff]
    %v534 = vld [vmem:[#allocation4 + $0x20] sm:$0xff]
    %v535 = vld [vmem:[#allocation4 + $0x28] sm:$0xff]
    %v536 = vld [vmem:[#allocation4 + $0x30] sm:$0xff]
    %v537 = vld [vmem:[#allocation4 + $0x38] sm:$0xff]
    %v538 = vld [vmem:[#allocation3] sm:$0xff]
    %v539 = vld [vmem:[#allocation3 + $0x8] sm:$0xff]
    %v540 = vld [vmem:[#allocation3 + $0x10] sm:$0xff]
    %v541 = vld [vmem:[#allocation3 + $0x18] sm:$0xff]
    %v542 = vld [vmem:[#allocation3 + $0x20] sm:$0xff]
    %v543 = vld [vmem:[#allocation3 + $0x28] sm:$0xff]
    %v544 = vld [vmem:[#allocation3 + $0x30] sm:$0xff]
    %v545 = vld [vmem:[#allocation3 + $0x38] sm:$0xff]
    %v546 = vld [vmem:[#allocation3 + $0x40] sm:$0xff]
    %v547 = vld [vmem:[#allocation3 + $0x48] sm:$0xff]
    %v548 = vld [vmem:[#allocation3 + $0x50] sm:$0xff]
    %v549 = vld [vmem:[#allocation3 + $0x58] sm:$0xff]
    %v550 = vld [vmem:[#allocation3 + $0x60] sm:$0xff]
    %v551 = vld [vmem:[#allocation3 + $0x68] sm:$0xff]
    %v552 = vld [vmem:[#allocation3 + $0x70] sm:$0xff]
    %v553 = vld [vmem:[#allocation3 + $0x78] sm:$0xff]
    %v562 = vunpack.c.l.b16 %v530
    %v563 = vunpack.c.h.b16 %v530
    %v564 = vunpack.c.l.b16 %v531
    %v565 = vunpack.c.h.b16 %v531
    %v566 = vunpack.c.l.b16 %v532
    %v567 = vunpack.c.h.b16 %v532
    %v568 = vunpack.c.l.b16 %v533
    %v569 = vunpack.c.h.b16 %v533
    %v570 = vunpack.c.l.b16 %v534
    %v571 = vunpack.c.h.b16 %v534
    %v572 = vunpack.c.l.b16 %v535
    %v573 = vunpack.c.h.b16 %v535
    %v574 = vunpack.c.l.b16 %v536
    %v575 = vunpack.c.h.b16 %v536
    %v576 = vunpack.c.l.b16 %v537
    %v577 = vunpack.c.h.b16 %v537
    %v578 = vpack.c.b16 %v564, %v562
    %v579 = vpack.c.b16 %v565, %v563
    %v580 = vpack.c.b16 %v568, %v566
    %v581 = vpack.c.b16 %v569, %v567
    %v582 = vpack.c.b16 %v572, %v570
    %v583 = vpack.c.b16 %v573, %v571
    %v584 = vpack.c.b16 %v576, %v574
    %v585 = vpack.c.b16 %v577, %v575
    %594 = vmatprep.subr.bf16.mxu0 0
    %595 = vmatpush1.bf16.msra.mxu0 %v538
    %596 = vmatprep.subr.bf16.mxu0 0
    %597 = vmatpush1.bf16.msra.mxu0 %v539
    %598 = vmatprep.subr.bf16.mxu0 0
    %599 = vmatpush1.bf16.msra.mxu0 %v540
    %600 = vmatprep.subr.bf16.mxu0 0
    %601 = vmatpush1.bf16.msra.mxu0 %v541
    %602 = vmatprep.subr.bf16.mxu0 0
    %603 = vmatpush1.bf16.msra.mxu0 %v542
    %604 = vmatprep.subr.bf16.mxu0 0
    %605 = vmatpush1.bf16.msra.mxu0 %v543
    %606 = vmatprep.subr.bf16.mxu0 0
    %607 = vmatpush1.bf16.msra.mxu0 %v544
    %608 = vmatprep.subr.bf16.mxu0 0
    %609 = vmatpush1.bf16.msra.mxu0 %v545
    %610 = vmatprep.subr.bf16.mxu0 0
    %611 = vmatpush1.bf16.msra.mxu0 %v546
    %612 = vmatprep.subr.bf16.mxu0 0
    %613 = vmatpush1.bf16.msra.mxu0 %v547
    %614 = vmatprep.subr.bf16.mxu0 0
    %615 = vmatpush1.bf16.msra.mxu0 %v548
    %616 = vmatprep.subr.bf16.mxu0 0
    %617 = vmatpush1.bf16.msra.mxu0 %v549
    %618 = vmatprep.subr.bf16.mxu0 0
    %619 = vmatpush1.bf16.msra.mxu0 %v550
    %620 = vmatprep.subr.bf16.mxu0 0
    %621 = vmatpush1.bf16.msra.mxu0 %v551
    %622 = vmatprep.subr.bf16.mxu0 0
    %623 = vmatpush1.bf16.msra.mxu0 %v552
    %624 = vmatprep.subr.bf16.mxu0 0
    %625 = vmatpush1.bf16.msra.mxu0 %v553
    %626 = vmatprep.mubr.bf16.mxu0 %v579
    %627 = vmatmul.mubr.bf16.gmra.mrb[0].mxu0 %v578
    %v628 = vpop.f32.mrb[0].mxu0
    %v629 = vadd.f32 0.0, %v628
    %v630 = vpop.f32.mrb[0].mxu0
    %v631 = vpop.f32.mrb[0].mxu0
    %v632 = vadd.f32 0.0, %v631
    %v633 = vpop.f32.mrb[0].mxu0
    %634 = vmatprep.mubr.bf16.mxu0 %v581
    %635 = vmatmul.mubr.bf16.gmra.mrb[0].mxu0 %v580
    %v636 = vpop.f32.mrb[0].mxu0
    %v637 = vadd.f32 0.0, %v636
    %v638 = vpop.f32.mrb[0].mxu0
    %v639 = vpop.f32.mrb[0].mxu0
    %v640 = vadd.f32 0.0, %v639
    %v641 = vpop.f32.mrb[0].mxu0
    %642 = vmatprep.mubr.bf16.mxu0 %v583
    %643 = vmatmul.mubr.bf16.gmra.mrb[0].mxu0 %v582
    %v644 = vpop.f32.mrb[0].mxu0
    %v645 = vadd.f32 0.0, %v644
    %v646 = vpop.f32.mrb[0].mxu0
    %v647 = vpop.f32.mrb[0].mxu0
    %v648 = vadd.f32 0.0, %v647
    %v649 = vpop.f32.mrb[0].mxu0
    %650 = vmatprep.mubr.bf16.mxu0 %v585
    %651 = vmatmul.mubr.bf16.gmra.mrb[0].mxu0 %v584
    %v652 = vpop.f32.mrb[0].mxu0
    %v653 = vadd.f32 0.0, %v652
    %v654 = vpop.f32.mrb[0].mxu0
    %v655 = vpop.f32.mrb[0].mxu0
    %v656 = vadd.f32 0.0, %v655
    %v657 = vpop.f32.mrb[0].mxu0
    %658 = vdwg.mxu0
    %v659 = vld [vmem:[%s3] sm:$0xff]
    %v660 = vld [vmem:[%s3 + $0x8] sm:$0xff]
    %v661 = vld [vmem:[%s3 + $0x10] sm:$0xff]
    %v662 = vld [vmem:[%s3 + $0x18] sm:$0xff]
    %v663 = vld [vmem:[%s3 + $0x20] sm:$0xff]
    %v664 = vld [vmem:[%s3 + $0x28] sm:$0xff]
    %v665 = vld [vmem:[%s3 + $0x30] sm:$0xff]
    %v666 = vld [vmem:[%s3 + $0x38] sm:$0xff]
    %668 = vset.pattern.permute.xlu0 0
    %669 = vperm.xlu0 %668, %v659
    %v670 = vpop.permute.xlu0 %669
    %673 = vset.pattern.permute.xlu0 0
    %674 = vperm.xlu0 %673, %v660
    %v675 = vpop.permute.xlu0 %674
    %678 = vset.pattern.permute.xlu0 0
    %679 = vperm.xlu0 %678, %v661
    %v680 = vpop.permute.xlu0 %679
    %683 = vset.pattern.permute.xlu0 0
    %684 = vperm.xlu0 %683, %v662
    %v685 = vpop.permute.xlu0 %684
    %688 = vset.pattern.permute.xlu0 0
    %689 = vperm.xlu0 %688, %v663
    %v690 = vpop.permute.xlu0 %689
    %693 = vset.pattern.permute.xlu0 0
    %694 = vperm.xlu0 %693, %v664
    %v695 = vpop.permute.xlu0 %694
    %698 = vset.pattern.permute.xlu0 0
    %699 = vperm.xlu0 %698, %v665
    %v700 = vpop.permute.xlu0 %699
    %703 = vset.pattern.permute.xlu0 0
    %704 = vperm.xlu0 %703, %v666
    %v705 = vpop.permute.xlu0 %704
    %v707 = vmul.f32 %v629, %v670
    %v708 = vmul.f32 %v632, %v675
    %v709 = vmul.f32 %v637, %v680
    %v710 = vmul.f32 %v640, %v685
    %v711 = vmul.f32 %v645, %v690
    %v712 = vmul.f32 %v648, %v695
    %v713 = vmul.f32 %v653, %v700
    %v714 = vmul.f32 %v656, %v705
    %v715 = vld [vmem:[%s4] sm:$0x1]
    %v717 = vlaneseq
    %v718 = vshrl.u32 %v717, 7
    %v719 = vsub.s32 0, %v718
    %v720 = vrot.slane %v715, %v719
    %v722 = vadd.f32 %v707, %v720
    %v723 = vadd.f32 %v708, %v720
    %v724 = vadd.f32 %v709, %v720
    %v725 = vadd.f32 %v710, %v720
    %v726 = vadd.f32 %v711, %v720
    %v727 = vadd.f32 %v712, %v720
    %v728 = vadd.f32 %v713, %v720
    %v729 = vadd.f32 %v714, %v720
    %v730 = vld [vmem:[#allocation2 + $0x20] sm:$0xff]
    %v731 = vld [vmem:[#allocation2 + $0x48] sm:$0xff]
    %v732 = vld [vmem:[#allocation2 + $0x70] sm:$0xff]
    %v733 = vld [vmem:[#allocation2 + $0x98] sm:$0xff]
    %v734 = vld [vmem:[#allocation2 + $0xc0] sm:$0xff]
    %v735 = vld [vmem:[#allocation2 + $0xe8] sm:$0xff]
    %v736 = vld [vmem:[#allocation2 + $0x110] sm:$0xff]
    %v737 = vld [vmem:[#allocation2 + $0x138] sm:$0xff]
    %v738 = vadd.f32 %v722, %v730
    %v739 = vadd.f32 %v723, %v731
    %v740 = vadd.f32 %v724, %v732
    %v741 = vadd.f32 %v725, %v733
    %v742 = vadd.f32 %v726, %v734
    %v743 = vadd.f32 %v727, %v735
    %v744 = vadd.f32 %v728, %v736
    %v745 = vadd.f32 %v729, %v737
    %v746 = vadd.f32 %v738, %v739
    %v747 = vadd.f32 %v746, %v740
    %v748 = vadd.f32 %v747, %v741
    %v749 = vadd.f32 %v748, %v742
    %v750 = vadd.f32 %v749, %v743
    %v751 = vadd.f32 %v750, %v744
    %v752 = vadd.f32 %v751, %v745
    %v753 = vrot.slane %v752, 4
    %v754 = vadd.f32 %v752, %v753
    %v755 = vrot.slane %v754, 2
    %v756 = vadd.f32 %v754, %v755
    %v757 = vrot.slane %v756, 1
    %v758 = vadd.f32 %v756, %v757
    %v759 = vrcp.pop 64.0
    %v760 = vmul.f32 %v758, %v759
    %v761 = vsub.f32 %v738, %v760
    %v762 = vsub.f32 %v739, %v760
    %v763 = vsub.f32 %v740, %v760
    %v764 = vsub.f32 %v741, %v760
    %v765 = vsub.f32 %v742, %v760
    %v766 = vsub.f32 %v743, %v760
    %v767 = vsub.f32 %v744, %v760
    %v768 = vsub.f32 %v745, %v760
    %v769 = vmul.f32 %v761, %v761
    %v770 = vmul.f32 %v762, %v762
    %v771 = vmul.f32 %v763, %v763
    %v772 = vmul.f32 %v764, %v764
    %v773 = vmul.f32 %v765, %v765
    %v774 = vmul.f32 %v766, %v766
    %v775 = vmul.f32 %v767, %v767
    %v776 = vmul.f32 %v768, %v768
    %v777 = vadd.f32 %v769, %v770
    %v778 = vadd.f32 %v777, %v771
    %v779 = vadd.f32 %v778, %v772
    %v780 = vadd.f32 %v779, %v773
    %v781 = vadd.f32 %v780, %v774
    %v782 = vadd.f32 %v781, %v775
    %v783 = vadd.f32 %v782, %v776
    %v784 = vrot.slane %v783, 4
    %v785 = vadd.f32 %v783, %v784
    %v786 = vrot.slane %v785, 2
    %v787 = vadd.f32 %v785, %v786
    %v788 = vrot.slane %v787, 1
    %v789 = vadd.f32 %v787, %v788
    %v790 = vmul.f32 %v789, %v759
    %v791 = vadd.f32 %v790, 1e-05
    %v792 = vrsqrt.pop %v791
    %v793 = vmul.f32 %v761, %v792
    %v794 = vmul.f32 %v762, %v792
    %v795 = vmul.f32 %v763, %v792
    %v796 = vmul.f32 %v764, %v792
    %v797 = vmul.f32 %v765, %v792
    %v798 = vmul.f32 %v766, %v792
    %v799 = vmul.f32 %v767, %v792
    %v800 = vmul.f32 %v768, %v792
    %v801 = vld [vmem:[%s5] sm:$0x1]
    %v803 = vlaneseq
    %v804 = vshrl.u32 %v803, 7
    %v805 = vsub.s32 0, %v804
    %v806 = vrot.slane %v801, %v805
    %v808 = vmul.f32 %v793, %v806
    %v809 = vmul.f32 %v794, %v806
    %v810 = vmul.f32 %v795, %v806
    %v811 = vmul.f32 %v796, %v806
    %v812 = vmul.f32 %v797, %v806
    %v813 = vmul.f32 %v798, %v806
    %v814 = vmul.f32 %v799, %v806
    %v815 = vmul.f32 %v800, %v806
    %v816 = vld [vmem:[%s6] sm:$0x1]
    %v818 = vlaneseq
    %v819 = vshrl.u32 %v818, 7
    %v820 = vsub.s32 0, %v819
    %v821 = vrot.slane %v816, %v820
    %v823 = vadd.f32 %v808, %v821
    %v824 = vadd.f32 %v809, %v821
    %v825 = vadd.f32 %v810, %v821
    %v826 = vadd.f32 %v811, %v821
    %v827 = vadd.f32 %v812, %v821
    %v828 = vadd.f32 %v813, %v821
    %v829 = vadd.f32 %v814, %v821
    %v830 = vadd.f32 %v815, %v821
    %v831 = vmax.f32 %v823, 0.0
    %v832 = vmax.f32 %v824, 0.0
    %v833 = vmax.f32 %v825, 0.0
    %v834 = vmax.f32 %v826, 0.0
    %v835 = vmax.f32 %v827, 0.0
    %v836 = vmax.f32 %v828, 0.0
    %v837 = vmax.f32 %v829, 0.0
    %v838 = vmax.f32 %v830, 0.0
    %839 = vst [vmem:[#allocation7] sm:$0xff] %v831
    %840 = vst [vmem:[#allocation7 + $0x8] sm:$0xff] %v832
    %841 = vst [vmem:[#allocation7 + $0x10] sm:$0xff] %v833
    %842 = vst [vmem:[#allocation7 + $0x18] sm:$0xff] %v834
    %843 = vst [vmem:[#allocation7 + $0x20] sm:$0xff] %v835
    %844 = vst [vmem:[#allocation7 + $0x28] sm:$0xff] %v836
    %845 = vst [vmem:[#allocation7 + $0x30] sm:$0xff] %v837
    %846 = vst [vmem:[#allocation7 + $0x38] sm:$0xff] %v838
    // Predicated region
    $region34: #{tpu_custom_call.1} parent=1 // pred_check
      _
    $region35: #{tpu_custom_call.1} parent=1 // pred_check_branch
      %848 = sbr.rel (0) target = $region37
    $region36: #{tpu_custom_call.1} parent=1 // pred_region
      %s850 = ssub.s32 1024, 1024
      %851 = vsyncadd [#allocation6], %s850
      %s852 = sshll.u32 [#allocation7], 4
      %s853 = int_to_ptr.vmem [resolvable:$true] %s852
      %858 = dma.vmem_to_hbm [thread:$0]  %s853, 1024, %s7, [#allocation6], 128, 128, 8
    $region37: #{tpu_custom_call.1} parent=1 // pred_fallthru
      _
    // Predicated region
    $region38: #{tpu_custom_call.1} parent=1 // pred_check
      _
    $region39: #{tpu_custom_call.1} parent=1 // pred_check_branch
      %860 = sbr.rel (0) target = $region41
    $region40: #{tpu_custom_call.1} parent=1 // pred_region
      %861 = dma.done [#allocation6], 1024
    $region41: #{tpu_custom_call.1} parent=1 // pred_fallthru
      _
    %862 = vsyncpa [#allocation5], 1
    %863 = vsyncpa [#allocation6], 1

</llo_original>
